<compile_context>
chip_gen: v5e
topology: v5e:2x2
jax: 0.10.0
libtpu: 0.0.40
codegen_flags: <defaults>
</compile_context>

<pallas_src>
import jax
import jax.numpy as jnp
from jax.experimental import pallas as pl
from jax.experimental.pallas import tpu as pltpu

HIDDEN = 128          # encoder output width required by fc_mu / fc_logvar (spec)
HEADS_LANES = 128     # lane width of the fused (mu | logvar) output slab
MAX_TILE_B = 512      # per-step overhead ~0.35us -> big tiles for large B
VMEM_BUDGET = 32 * 1024 * 1024   # keep well under v7x's 64 MiB physical VMEM


# ----------------------------------------------------------------------------
# Pallas kernel: fused VAE forward for one batch tile
# ----------------------------------------------------------------------------
def vae_forward_kernel(
    x_ref,      # [TB, D_in]        bf16  input tile (cast in wrapper)
    we_ref,     # [D_in, H]         bf16  encoder weight
    be_ref,     # [1, H]            f32   encoder bias
    wh_ref,     # [H, 128]          bf16  fused (mu | logvar | 0) head weight
    bh_ref,     # [1, 128]          f32   fused head bias
    wd1_ref,    # [L, H]            bf16  decoder layer-1 weight
    bd1_ref,    # [1, H]            f32   decoder layer-1 bias
    wd2_ref,    # [H, D_in]         bf16  decoder layer-2 weight
    bd2_ref,    # [1, D_in]         f32   decoder layer-2 bias
    eps_ref,    # [TB, L]           f32   N(0,1) noise
    xhat_ref,   # out: [TB, D_in]   f32   reconstruction
    heads_ref,  # out: [TB, 128]    f32   lane-dense slab = [mu | logvar | 0]
):
    L = eps_ref.shape[-1]

    # encoder: h = relu(x @ We + be)   (bf16 MXU inputs, f32 accumulate)
    h = jnp.dot(x_ref[...], we_ref[...],
                preferred_element_type=jnp.float32) + be_ref[...]
    h = jnp.maximum(h, 0.0)

    # fused mu/logvar heads: single [H, 128] matmul, lane-dense result
    heads = jnp.dot(h.astype(jnp.bfloat16), wh_ref[...],
                    preferred_element_type=jnp.float32) + bh_ref[...]
    mu = heads[:, :L]            # [TB, L]
    logvar = heads[:, L:2 * L]   # [TB, L]

    # reparameterize: z = mu + eps * exp(0.5 * logvar)
    z = mu + eps_ref[...] * jnp.exp(0.5 * logvar)

    # decoder: x_hat = sigmoid(relu(z @ Wd1 + bd1) @ Wd2 + bd2)
    d = jnp.dot(z.astype(jnp.bfloat16), wd1_ref[...],
                preferred_element_type=jnp.float32) + bd1_ref[...]
    d = jnp.maximum(d, 0.0)
    logits = jnp.dot(d.astype(jnp.bfloat16), wd2_ref[...],
                     preferred_element_type=jnp.float32) + bd2_ref[...]
    # exact sigmoid via a single EUP tanh per element
    x_hat = 0.5 * jnp.tanh(0.5 * logits) + 0.5

    xhat_ref[...] = x_hat.astype(xhat_ref.dtype)
    heads_ref[...] = heads.astype(heads_ref.dtype)


# ----------------------------------------------------------------------------
# Wrapper
# ----------------------------------------------------------------------------
def vae_forward(x, packed, eps, latent_dim):
    B, D_in = x.shape
    H = packed["we"].shape[1]
    L = latent_dim
    assert packed["wd1"].shape[0] == L and 2 * L <= HEADS_LANES

    # --- adaptive batch tiling -------------------------------------------------
    B8 = ((B + 7) // 8) * 8                  # pad only to the f32/bf16 sublane multiple
    tile_b = min(B8, MAX_TILE_B)

    w_bytes = sum(int(v.size) * v.dtype.itemsize for v in packed.values())

    def vmem_estimate(tb):                   # rough: double-buffered tiles + weights
        return 2 * tb * (D_in * 2 + D_in * 4 + HEADS_LANES * 4 + L * 4) + 2 * w_bytes

    while tile_b > 8 and vmem_estimate(tile_b) > VMEM_BUDGET:
        tile_b = ((tile_b // 2 + 7) // 8) * 8

    n_tiles = pl.cdiv(B8, tile_b)
    if n_tiles > 1 and n_tiles % 2:
        n_tiles += 1                         # even grid -> both v7x TensorCores busy
    tile_b = ((pl.cdiv(B8, n_tiles) + 7) // 8) * 8
    B_pad = n_tiles * tile_b

    # --- pad (skipped entirely when already aligned) + fused bf16 cast of x ----
    if B_pad == B:
        x_p = x.astype(jnp.bfloat16)
        eps_p = eps.astype(jnp.float32)
    else:
        x_p = jnp.zeros((B_pad, D_in), jnp.bfloat16).at[:B].set(x.astype(jnp.bfloat16))
        eps_p = jnp.zeros((B_pad, L), jnp.float32).at[:B].set(eps)

    row = lambda i: (i, 0)   # batch-tiled arrays advance with the grid
    fix = lambda i: (0, 0)   # weights / biases stay resident across the grid
    # (weights use the default double-buffering; pl.Buffered(1) would shave a few
    #  hundred KB of VMEM if tile_b / D_in are ever pushed toward the budget.)

    bytes_io = (B_pad * D_in * 2            # x (bf16)
                + B_pad * L * 4             # eps
                + B_pad * D_in * 4          # x_hat
                + B_pad * HEADS_LANES * 4   # heads slab
                + w_bytes)
    cost = pl.CostEstimate(
        flops=2 * B_pad * (D_in * H + H * HEADS_LANES + L * H + H * D_in),
        transcendentals=B_pad * (L + D_in),
        bytes_accessed=int(bytes_io),
    )

    x_hat_p, heads_p = pl.pallas_call(
        vae_forward_kernel,
        grid=(n_tiles,),
        in_specs=[
            pl.BlockSpec((tile_b, D_in), row),       # x (bf16)
            pl.BlockSpec((D_in, H), fix),            # we
            pl.BlockSpec((1, H), fix),               # be
            pl.BlockSpec((H, HEADS_LANES), fix),     # wh (fused mu|logvar)
            pl.BlockSpec((1, HEADS_LANES), fix),     # bh
            pl.BlockSpec((L, H), fix),               # wd1
            pl.BlockSpec((1, H), fix),               # bd1
            pl.BlockSpec((H, D_in), fix),            # wd2
            pl.BlockSpec((1, D_in), fix),            # bd2
            pl.BlockSpec((tile_b, L), row),          # eps
        ],
        out_specs=(
            pl.BlockSpec((tile_b, D_in), row),       # x_hat
            pl.BlockSpec((tile_b, HEADS_LANES), row),  # heads slab
        ),
        out_shape=(
            jax.ShapeDtypeStruct((B_pad, D_in), jnp.float32),
            jax.ShapeDtypeStruct((B_pad, HEADS_LANES), jnp.float32),
        ),
        compiler_params=pltpu.CompilerParams(
            dimension_semantics=("parallel",),       # batch tiles -> v7x megacore
            vmem_limit_bytes=48 * 1024 * 1024,
        ),
        cost_estimate=cost,
    )(x_p, packed["we"], packed["be"], packed["wh"], packed["bh"],
      packed["wd1"], packed["bd1"], packed["wd2"], packed["bd2"], eps_p)

    x_hat = x_hat_p[:B]
    mu = heads_p[:B, :L]
    logvar = heads_p[:B, L:2 * L]
    return x_hat, mu, logvar


# ----------------------------------------------------------------------------
# Parameter construction
# ----------------------------------------------------------------------------
def init_params(key, d_in, hidden, latent):
    """Raw f32 parameters, stored as (in, out) so y = x @ W + b."""
    ks = jax.random.split(key, 5)

    def lin(kw, fan_in, fan_out):
        scale = 1.0 / jnp.sqrt(fan_in)
        return jax.random.uniform(kw, (fan_in, fan_out), jnp.float32, -scale, scale)

    return {
        "we":  lin(ks[0], d_in, hidden),
        "be":  jnp.zeros((1, hidden), jnp.float32),
        "wmu": lin(ks[1], hidden, latent),
        "bmu": jnp.zeros((1, latent), jnp.float32),
        "wlv": lin(ks[2], hidden, latent),
        "blv": jnp.zeros((1, latent), jnp.float32),
        "wd1": lin(ks[3], latent, hidden),
        "bd1": jnp.zeros((1, hidden), jnp.float32),
        "wd2": lin(ks[4], hidden, d_in),
        "bd2": jnp.zeros((1, d_in), jnp.float32),
    }


def pack_params(p, latent):
    """Fuse mu/logvar heads into one 128-lane slab; cast weights to bf16."""
    H = p["we"].shape[1]
    assert 2 * latent <= HEADS_LANES
    wh = jnp.zeros((H, HEADS_LANES), jnp.float32)
    wh = wh.at[:, :latent].set(p["wmu"]).at[:, latent:2 * latent].set(p["wlv"])
    bh = jnp.zeros((1, HEADS_LANES), jnp.float32)
    bh = bh.at[:, :latent].set(p["bmu"]).at[:, latent:2 * latent].set(p["blv"])
    bf16 = jnp.bfloat16
    return {
        "we": p["we"].astype(bf16),  "be": p["be"],
        "wh": wh.astype(bf16),       "bh": bh,
        "wd1": p["wd1"].astype(bf16), "bd1": p["bd1"],
        "wd2": p["wd2"].astype(bf16), "bd2": p["bd2"],
    }


# ----------------------------------------------------------------------------
# Pure-JAX f32 reference (semantics check)
# ----------------------------------------------------------------------------
def vae_forward_ref(x, p, eps):
    h = jnp.maximum(x @ p["we"] + p["be"], 0.0)
    mu = h @ p["wmu"] + p["bmu"]
    logvar = h @ p["wlv"] + p["blv"]
    z = mu + eps * jnp.exp(0.5 * logvar)
    d = jnp.maximum(z @ p["wd1"] + p["bd1"], 0.0)
    x_hat = jax.nn.sigmoid(d @ p["wd2"] + p["bd2"])
    return x_hat, mu, logvar


if __name__ == "__main__":
    B, D_IN, LATENT = 8, 256, 32

    key = jax.random.PRNGKey(0)
    k_x, k_p, k_eps = jax.random.split(key, 3)

    x = jax.random.normal(k_x, (B, D_IN), jnp.float32)
    params = init_params(k_p, D_IN, HIDDEN, LATENT)
    # eps corresponds to torch.randn_like(std); drawn deterministically here so
    # the kernel can be checked against the reference.
    # TODO(synk): eps could be generated in-kernel via pltpu.prng_seed +
    # pltpu.stateful_normal (seeded per grid step) to drop this input entirely.
    eps = jax.random.normal(k_eps, (B, LATENT), jnp.float32)

    packed = pack_params(params, LATENT)
    x_hat, mu, logvar = vae_forward(x, packed, eps, LATENT)
    jax.block_until_ready((x_hat, mu, logvar))

    # correctness check against the pure-JAX f32 reference
    # (bf16 weights + bf16 x tolerance)
    xr, mr, lr = vae_forward_ref(x, params, eps)
    assert x_hat.shape == (B, D_IN)
    assert mu.shape == (B, LATENT) and logvar.shape == (B, LATENT)
    assert jnp.allclose(mu, mr, atol=3e-2, rtol=3e-2)
    assert jnp.allclose(logvar, lr, atol=3e-2, rtol=3e-2)
    assert jnp.allclose(x_hat, xr, atol=3e-2, rtol=3e-2)

    print("KERNEL_OK")
</pallas_src>

<mosaic_0001>
module attributes {stable_mosaic.version = 11 : i64} {
  func.func @vae_forward_kernel(%arg0: i32, %arg1: memref<8x256xbf16, #tpu.memory_space<vmem>>, %arg2: memref<256x128xbf16, #tpu.memory_space<vmem>>, %arg3: memref<1x128xf32, #tpu.memory_space<vmem>>, %arg4: memref<128x128xbf16, #tpu.memory_space<vmem>>, %arg5: memref<1x128xf32, #tpu.memory_space<vmem>>, %arg6: memref<32x128xbf16, #tpu.memory_space<vmem>>, %arg7: memref<1x128xf32, #tpu.memory_space<vmem>>, %arg8: memref<128x256xbf16, #tpu.memory_space<vmem>>, %arg9: memref<1x256xf32, #tpu.memory_space<vmem>>, %arg10: memref<8x32xf32, #tpu.memory_space<vmem>>, %arg11: memref<8x256xf32, #tpu.memory_space<vmem>>, %arg12: memref<8x128xf32, #tpu.memory_space<vmem>>) attributes {dimension_semantics = [#tpu.dimension_semantics<parallel>], iteration_bounds = array<i64: 1>, scalar_prefetch = 0 : i64, scratch_operands = 0 : i64, tpu.core_type = #tpu.core_type<tc>, window_params = [{transform_indices = @transform_0, window_bounds = array<i64: 8, 256>}, {pipeline_mode = #tpu.pipeline_mode<synchronous>, transform_indices = @transform_1, window_bounds = array<i64: 256, 128>}, {pipeline_mode = #tpu.pipeline_mode<synchronous>, transform_indices = @transform_2, window_bounds = array<i64: 1, 128>}, {pipeline_mode = #tpu.pipeline_mode<synchronous>, transform_indices = @transform_3, window_bounds = array<i64: 128, 128>}, {pipeline_mode = #tpu.pipeline_mode<synchronous>, transform_indices = @transform_4, window_bounds = array<i64: 1, 128>}, {pipeline_mode = #tpu.pipeline_mode<synchronous>, transform_indices = @transform_5, window_bounds = array<i64: 32, 128>}, {pipeline_mode = #tpu.pipeline_mode<synchronous>, transform_indices = @transform_6, window_bounds = array<i64: 1, 128>}, {pipeline_mode = #tpu.pipeline_mode<synchronous>, transform_indices = @transform_7, window_bounds = array<i64: 128, 256>}, {pipeline_mode = #tpu.pipeline_mode<synchronous>, transform_indices = @transform_8, window_bounds = array<i64: 1, 256>}, {transform_indices = @transform_9, window_bounds = array<i64: 8, 32>}, {transform_indices = @transform_10, window_bounds = array<i64: 8, 256>}, {transform_indices = @transform_11, window_bounds = array<i64: 8, 128>}]} {
    %c0 = arith.constant 0 : index
    %c0_0 = arith.constant 0 : index
    %0 = vector.load %arg1[%c0, %c0_0] : memref<8x256xbf16, #tpu.memory_space<vmem>>, vector<8x256xbf16>
    %c0_1 = arith.constant 0 : index
    %c0_2 = arith.constant 0 : index
    %1 = vector.load %arg2[%c0_1, %c0_2] : memref<256x128xbf16, #tpu.memory_space<vmem>>, vector<256x128xbf16>
    %cst = arith.constant dense<0.000000e+00> : vector<8x128xf32>
    %2 = tpu.matmul %0, %1, %cst {dimension_numbers = #tpu.dot_dimension_numbers<[1], [0], [0], [1], [0, 0, 1, 1], [], []>} : vector<8x256xbf16>, vector<256x128xbf16>, vector<8x128xf32> -> vector<8x128xf32>
    %c0_3 = arith.constant 0 : index
    %c0_4 = arith.constant 0 : index
    %3 = vector.load %arg3[%c0_3, %c0_4] : memref<1x128xf32, #tpu.memory_space<vmem>>, vector<1x128xf32>
    %4 = vector.broadcast %3 : vector<1x128xf32> to vector<8x128xf32>
    %5 = arith.addf %2, %4 : vector<8x128xf32>
    %cst_5 = arith.constant 0.000000e+00 : f32
    %6 = vector.broadcast %cst_5 : f32 to vector<8x128xf32>
    %7 = arith.maximumf %5, %6 : vector<8x128xf32>
    %8 = arith.truncf %7 : vector<8x128xf32> to vector<8x128xbf16>
    %c0_6 = arith.constant 0 : index
    %c0_7 = arith.constant 0 : index
    %9 = vector.load %arg4[%c0_6, %c0_7] : memref<128x128xbf16, #tpu.memory_space<vmem>>, vector<128x128xbf16>
    %cst_8 = arith.constant dense<0.000000e+00> : vector<8x128xf32>
    %10 = tpu.matmul %8, %9, %cst_8 {dimension_numbers = #tpu.dot_dimension_numbers<[1], [0], [0], [1], [0, 0, 1, 1], [], []>} : vector<8x128xbf16>, vector<128x128xbf16>, vector<8x128xf32> -> vector<8x128xf32>
    %c0_9 = arith.constant 0 : index
    %c0_10 = arith.constant 0 : index
    %11 = vector.load %arg5[%c0_9, %c0_10] : memref<1x128xf32, #tpu.memory_space<vmem>>, vector<1x128xf32>
    %12 = vector.broadcast %11 : vector<1x128xf32> to vector<8x128xf32>
    %13 = arith.addf %10, %12 : vector<8x128xf32>
    %14 = vector.extract_strided_slice %13 {offsets = [0, 0], sizes = [8, 32], strides = [1, 1]} : vector<8x128xf32> to vector<8x32xf32>
    %15 = vector.extract_strided_slice %13 {offsets = [0, 32], sizes = [8, 32], strides = [1, 1]} : vector<8x128xf32> to vector<8x32xf32>
    %c0_11 = arith.constant 0 : index
    %c0_12 = arith.constant 0 : index
    %16 = vector.load %arg10[%c0_11, %c0_12] : memref<8x32xf32, #tpu.memory_space<vmem>>, vector<8x32xf32>
    %cst_13 = arith.constant 5.000000e-01 : f32
    %17 = vector.broadcast %cst_13 : f32 to vector<8x32xf32>
    %18 = arith.mulf %17, %15 : vector<8x32xf32>
    %19 = math.exp %18 : vector<8x32xf32>
    %20 = arith.mulf %16, %19 : vector<8x32xf32>
    %21 = arith.addf %14, %20 : vector<8x32xf32>
    %22 = arith.truncf %21 : vector<8x32xf32> to vector<8x32xbf16>
    %c0_14 = arith.constant 0 : index
    %c0_15 = arith.constant 0 : index
    %23 = vector.load %arg6[%c0_14, %c0_15] : memref<32x128xbf16, #tpu.memory_space<vmem>>, vector<32x128xbf16>
    %cst_16 = arith.constant dense<0.000000e+00> : vector<8x128xf32>
    %24 = tpu.matmul %22, %23, %cst_16 {dimension_numbers = #tpu.dot_dimension_numbers<[1], [0], [0], [1], [0, 0, 1, 1], [], []>} : vector<8x32xbf16>, vector<32x128xbf16>, vector<8x128xf32> -> vector<8x128xf32>
    %c0_17 = arith.constant 0 : index
    %c0_18 = arith.constant 0 : index
    %25 = vector.load %arg7[%c0_17, %c0_18] : memref<1x128xf32, #tpu.memory_space<vmem>>, vector<1x128xf32>
    %26 = vector.broadcast %25 : vector<1x128xf32> to vector<8x128xf32>
    %27 = arith.addf %24, %26 : vector<8x128xf32>
    %cst_19 = arith.constant 0.000000e+00 : f32
    %28 = vector.broadcast %cst_19 : f32 to vector<8x128xf32>
    %29 = arith.maximumf %27, %28 : vector<8x128xf32>
    %30 = arith.truncf %29 : vector<8x128xf32> to vector<8x128xbf16>
    %c0_20 = arith.constant 0 : index
    %c0_21 = arith.constant 0 : index
    %31 = vector.load %arg8[%c0_20, %c0_21] : memref<128x256xbf16, #tpu.memory_space<vmem>>, vector<128x256xbf16>
    %cst_22 = arith.constant dense<0.000000e+00> : vector<8x256xf32>
    %32 = tpu.matmul %30, %31, %cst_22 {dimension_numbers = #tpu.dot_dimension_numbers<[1], [0], [0], [1], [0, 0, 1, 1], [], []>} : vector<8x128xbf16>, vector<128x256xbf16>, vector<8x256xf32> -> vector<8x256xf32>
    %c0_23 = arith.constant 0 : index
    %c0_24 = arith.constant 0 : index
    %33 = vector.load %arg9[%c0_23, %c0_24] : memref<1x256xf32, #tpu.memory_space<vmem>>, vector<1x256xf32>
    %34 = vector.broadcast %33 : vector<1x256xf32> to vector<8x256xf32>
    %35 = arith.addf %32, %34 : vector<8x256xf32>
    %cst_25 = arith.constant 5.000000e-01 : f32
    %36 = vector.broadcast %cst_25 : f32 to vector<8x256xf32>
    %37 = arith.mulf %36, %35 : vector<8x256xf32>
    %38 = math.tanh %37 : vector<8x256xf32>
    %cst_26 = arith.constant 5.000000e-01 : f32
    %39 = vector.broadcast %cst_26 : f32 to vector<8x256xf32>
    %40 = arith.mulf %39, %38 : vector<8x256xf32>
    %cst_27 = arith.constant 5.000000e-01 : f32
    %41 = vector.broadcast %cst_27 : f32 to vector<8x256xf32>
    %42 = arith.addf %40, %41 : vector<8x256xf32>
    %c0_28 = arith.constant 0 : index
    %c0_29 = arith.constant 0 : index
    %43 = vector.load %arg11[%c0_28, %c0_29] : memref<8x256xf32, #tpu.memory_space<vmem>>, vector<8x256xf32>
    tpu.vector_store %arg11[%c0_28, %c0_29], %42 {strides = array<i32>} : memref<8x256xf32, #tpu.memory_space<vmem>>, vector<8x256xf32>,
    %c0_30 = arith.constant 0 : index
    %c0_31 = arith.constant 0 : index
    %44 = vector.load %arg12[%c0_30, %c0_31] : memref<8x128xf32, #tpu.memory_space<vmem>>, vector<8x128xf32>
    tpu.vector_store %arg12[%c0_30, %c0_31], %13 {strides = array<i32>} : memref<8x128xf32, #tpu.memory_space<vmem>>, vector<8x128xf32>,
    return
  }
  func.func @transform_0(%arg0: i32) -> (i32, i32) {
    %c0_i32 = arith.constant 0 : i32
    %c0_i32_0 = arith.constant 0 : i32
    return %arg0, %c0_i32 : i32, i32
  }
  func.func @transform_1(%arg0: i32) -> (i32, i32) {
    %c0_i32 = arith.constant 0 : i32
    %c0_i32_0 = arith.constant 0 : i32
    %c0_i32_1 = arith.constant 0 : i32
    return %c0_i32, %c0_i32_0 : i32, i32
  }
  func.func @transform_2(%arg0: i32) -> (i32, i32) {
    %c0_i32 = arith.constant 0 : i32
    %c0_i32_0 = arith.constant 0 : i32
    %c0_i32_1 = arith.constant 0 : i32
    return %c0_i32, %c0_i32_0 : i32, i32
  }
  func.func @transform_3(%arg0: i32) -> (i32, i32) {
    %c0_i32 = arith.constant 0 : i32
    %c0_i32_0 = arith.constant 0 : i32
    %c0_i32_1 = arith.constant 0 : i32
    return %c0_i32, %c0_i32_0 : i32, i32
  }
  func.func @transform_4(%arg0: i32) -> (i32, i32) {
    %c0_i32 = arith.constant 0 : i32
    %c0_i32_0 = arith.constant 0 : i32
    %c0_i32_1 = arith.constant 0 : i32
    return %c0_i32, %c0_i32_0 : i32, i32
  }
  func.func @transform_5(%arg0: i32) -> (i32, i32) {
    %c0_i32 = arith.constant 0 : i32
    %c0_i32_0 = arith.constant 0 : i32
    %c0_i32_1 = arith.constant 0 : i32
    return %c0_i32, %c0_i32_0 : i32, i32
  }
  func.func @transform_6(%arg0: i32) -> (i32, i32) {
    %c0_i32 = arith.constant 0 : i32
    %c0_i32_0 = arith.constant 0 : i32
    %c0_i32_1 = arith.constant 0 : i32
    return %c0_i32, %c0_i32_0 : i32, i32
  }
  func.func @transform_7(%arg0: i32) -> (i32, i32) {
    %c0_i32 = arith.constant 0 : i32
    %c0_i32_0 = arith.constant 0 : i32
    %c0_i32_1 = arith.constant 0 : i32
    return %c0_i32, %c0_i32_0 : i32, i32
  }
  func.func @transform_8(%arg0: i32) -> (i32, i32) {
    %c0_i32 = arith.constant 0 : i32
    %c0_i32_0 = arith.constant 0 : i32
    %c0_i32_1 = arith.constant 0 : i32
    return %c0_i32, %c0_i32_0 : i32, i32
  }
  func.func @transform_9(%arg0: i32) -> (i32, i32) {
    %c0_i32 = arith.constant 0 : i32
    %c0_i32_0 = arith.constant 0 : i32
    return %arg0, %c0_i32 : i32, i32
  }
  func.func @transform_10(%arg0: i32) -> (i32, i32) {
    %c0_i32 = arith.constant 0 : i32
    %c0_i32_0 = arith.constant 0 : i32
    return %arg0, %c0_i32 : i32, i32
  }
  func.func @transform_11(%arg0: i32) -> (i32, i32) {
    %c0_i32 = arith.constant 0 : i32
    %c0_i32_0 = arith.constant 0 : i32
    return %arg0, %c0_i32 : i32, i32
  }
}

</mosaic_0001>

<llo_original>
// kernel: tpu_custom_call.1
$region0: #{tpu_custom_call.1}
  #allocation0 [shape = 'u32[]', space=smem, size = 0x4, offset = 0x4, fixed_abs, tag = 'smem constant byte address 0x4 - core index']
  #allocation1 [shape = 'u32[72,128]{1,0:T(1,128)}', space=vmem, size = 0x9000, scoped, tag = 'internal scratch']
  %s0 = inlined_call_operand.hbm [shape: bf16[8,256], index: 0, kind: input, shape index: {}]
  %s1 = inlined_call_operand.hbm [shape: bf16[256,128], index: 1, kind: input, shape index: {}]
  %s2 = inlined_call_operand.hbm [shape: f32[1,128], index: 2, kind: input, shape index: {}]
  %s3 = inlined_call_operand.hbm [shape: bf16[128,128], index: 3, kind: input, shape index: {}]
  %s4 = inlined_call_operand.hbm [shape: f32[1,128], index: 4, kind: input, shape index: {}]
  %s5 = inlined_call_operand.hbm [shape: bf16[32,128], index: 5, kind: input, shape index: {}]
  %s6 = inlined_call_operand.hbm [shape: f32[1,128], index: 6, kind: input, shape index: {}]
  %s7 = inlined_call_operand.hbm [shape: bf16[128,256], index: 7, kind: input, shape index: {}]
  %s8 = inlined_call_operand.hbm [shape: f32[1,256], index: 8, kind: input, shape index: {}]
  %s9 = inlined_call_operand.vmem [shape: f32[8,32], index: 9, kind: input, shape index: {}]
  %s10 = inlined_call_operand.hbm [shape: f32[8,256], index: 10, kind: output, shape index: {0}]
  %s11 = inlined_call_operand.hbm [shape: f32[8,128], index: 11, kind: output, shape index: {1}]
  %12 = xla_tuple %s10, %s11
  %s13 = sld [smem:[#allocation0]]
  $region94: #{tpu_custom_call.1} parent=0
    _
  %s15 = ssub.s32 1, %s13
  %s16 = scalar_select 0, %s15, %s13
  $region1: #{tpu_custom_call.1} parent=0
    #allocation2 [shape = 'u8[4096]{0}', space=vmem, size = 0x1000, scoped, tag = 'input window, operand 0, single buffered']
    #allocation3 [shape = 's32[1]{0}', space=sflag, size = 0x4, scoped, tag = 'scoped memory for tpu_custom_call.1']
    #allocation4 [shape = 's32[1]{0}', space=sflag, size = 0x4, scoped, tag = 'scoped memory for tpu_custom_call.1']
    #allocation5 [shape = 'u8[65536]{0}', space=vmem, size = 0x10000, scoped, tag = 'input window, operand 1, single buffered']
    #allocation6 [shape = 's32[1]{0}', space=sflag, size = 0x4, scoped, tag = 'scoped memory for tpu_custom_call.1']
    #allocation7 [shape = 'u8[512]{0}', space=vmem, size = 0x400, scoped, tag = 'input window, operand 2, single buffered']
    #allocation8 [shape = 'u8[32768]{0}', space=vmem, size = 0x8000, scoped, tag = 'input window, operand 3, single buffered']
    #allocation9 [shape = 's32[1]{0}', space=sflag, size = 0x4, scoped, tag = 'scoped memory for tpu_custom_call.1']
    #allocation10 [shape = 'u8[512]{0}', space=vmem, size = 0x400, scoped, tag = 'input window, operand 4, single buffered']
    #allocation11 [shape = 'u8[8192]{0}', space=vmem, size = 0x2000, scoped, tag = 'input window, operand 5, single buffered']
    #allocation12 [shape = 's32[1]{0}', space=sflag, size = 0x4, scoped, tag = 'scoped memory for tpu_custom_call.1']
    #allocation13 [shape = 'u8[512]{0}', space=vmem, size = 0x400, scoped, tag = 'input window, operand 6, single buffered']
    #allocation14 [shape = 'u8[65536]{0}', space=vmem, size = 0x10000, scoped, tag = 'input window, operand 7, single buffered']
    #allocation15 [shape = 's32[1]{0}', space=sflag, size = 0x4, scoped, tag = 'scoped memory for tpu_custom_call.1']
    #allocation16 [shape = 'u8[1024]{0}', space=vmem, size = 0x400, scoped, tag = 'input window, operand 8, single buffered']
    #allocation17 [shape = 'u8[8192]{0}', space=vmem, size = 0x2000, scoped, tag = 'output window, operand 0, single buffered']
    #allocation18 [shape = 'u8[4096]{0}', space=vmem, size = 0x1000, scoped, tag = 'output window, operand 1, single buffered']
    #allocation19 [shape = 's32[1]{0}', space=sflag, size = 0x4, scoped, tag = 'scoped memory for tpu_custom_call.1']
    %17 = vsyncpa [#allocation3], 0
    %18 = vsyncpa [#allocation6], 0
    %19 = vsyncpa [#allocation9], 0
    %20 = vsyncpa [#allocation12], 0
    %21 = vsyncpa [#allocation15], 0
    %22 = vsyncpa [#allocation4], 0
    %23 = vsyncpa [#allocation19], 0
    // Predicated region
    $region2: #{tpu_custom_call.1} parent=1 // pred_check
      _
    $region3: #{tpu_custom_call.1} parent=1 // pred_check_branch
      %25 = sbr.rel (0) target = $region5
    $region4: #{tpu_custom_call.1} parent=1 // pred_region
      %27 = vsyncadd [#allocation3], 0
      %s29 = sshll.u32 %s0, 4
      %s30 = int_to_ptr.hbm [resolvable:$true] %s29
      %s31 = sshll.u32 [#allocation2], 4
      %s32 = int_to_ptr.vmem [resolvable:$true] %s31
      %34 = dma.hbm_to_vmem [thread:$0]  %s30, 128, %s32, [#allocation3]
    $region5: #{tpu_custom_call.1} parent=1 // pred_fallthru
      _
    // Predicated region
    $region6: #{tpu_custom_call.1} parent=1 // pred_check
      _
    $region7: #{tpu_custom_call.1} parent=1 // pred_check_branch
      %36 = sbr.rel (0) target = $region9
    $region8: #{tpu_custom_call.1} parent=1 // pred_region
      %38 = vsyncadd [#allocation6], 0
      %s39 = sshll.u32 %s1, 4
      %s40 = int_to_ptr.hbm [resolvable:$true] %s39
      %s41 = sshll.u32 [#allocation5], 4
      %s42 = int_to_ptr.vmem [resolvable:$true] %s41
      %47 = dma.hbm_to_vmem [thread:$0]  %s40, 2048, %s42, [#allocation6], 64, 64, 4
    $region9: #{tpu_custom_call.1} parent=1 // pred_fallthru
      _
    // Predicated region
    $region10: #{tpu_custom_call.1} parent=1 // pred_check
      _
    $region11: #{tpu_custom_call.1} parent=1 // pred_check_branch
      %49 = sbr.rel (0) target = $region13
    $region12: #{tpu_custom_call.1} parent=1 // pred_region
      %51 = vsyncadd [#allocation6], 0
      %s53 = sshll.u32 %s2, 4
      %s54 = int_to_ptr.hbm [resolvable:$true] %s53
      %s55 = sshll.u32 [#allocation7], 4
      %s56 = int_to_ptr.vmem [resolvable:$true] %s55
      %58 = dma.hbm_to_vmem [thread:$0]  %s54, 16, %s56, [#allocation6]
    $region13: #{tpu_custom_call.1} parent=1 // pred_fallthru
      _
    // Predicated region
    $region14: #{tpu_custom_call.1} parent=1 // pred_check
      _
    $region15: #{tpu_custom_call.1} parent=1 // pred_check_branch
      %60 = sbr.rel (0) target = $region17
    $region16: #{tpu_custom_call.1} parent=1 // pred_region
      %62 = vsyncadd [#allocation9], 0
      %s63 = sshll.u32 %s3, 4
      %s64 = int_to_ptr.hbm [resolvable:$true] %s63
      %s65 = sshll.u32 [#allocation8], 4
      %s66 = int_to_ptr.vmem [resolvable:$true] %s65
      %71 = dma.hbm_to_vmem [thread:$0]  %s64, 1024, %s66, [#allocation9], 64, 64, 4
    $region17: #{tpu_custom_call.1} parent=1 // pred_fallthru
      _
    // Predicated region
    $region18: #{tpu_custom_call.1} parent=1 // pred_check
      _
    $region19: #{tpu_custom_call.1} parent=1 // pred_check_branch
      %73 = sbr.rel (0) target = $region21
    $region20: #{tpu_custom_call.1} parent=1 // pred_region
      %75 = vsyncadd [#allocation9], 0
      %s77 = sshll.u32 %s4, 4
      %s78 = int_to_ptr.hbm [resolvable:$true] %s77
      %s79 = sshll.u32 [#allocation10], 4
      %s80 = int_to_ptr.vmem [resolvable:$true] %s79
      %82 = dma.hbm_to_vmem [thread:$0]  %s78, 16, %s80, [#allocation9]
    $region21: #{tpu_custom_call.1} parent=1 // pred_fallthru
      _
    // Predicated region
    $region22: #{tpu_custom_call.1} parent=1 // pred_check
      _
    $region23: #{tpu_custom_call.1} parent=1 // pred_check_branch
      %84 = sbr.rel (0) target = $region25
    $region24: #{tpu_custom_call.1} parent=1 // pred_region
      %86 = vsyncadd [#allocation12], 0
      %s87 = sshll.u32 %s5, 4
      %s88 = int_to_ptr.hbm [resolvable:$true] %s87
      %s89 = sshll.u32 [#allocation11], 4
      %s90 = int_to_ptr.vmem [resolvable:$true] %s89
      %95 = dma.hbm_to_vmem [thread:$0]  %s88, 256, %s90, [#allocation12], 64, 64, 4
    $region25: #{tpu_custom_call.1} parent=1 // pred_fallthru
      _
    // Predicated region
    $region26: #{tpu_custom_call.1} parent=1 // pred_check
      _
    $region27: #{tpu_custom_call.1} parent=1 // pred_check_branch
      %97 = sbr.rel (0) target = $region29
    $region28: #{tpu_custom_call.1} parent=1 // pred_region
      %99 = vsyncadd [#allocation12], 0
      %s101 = sshll.u32 %s6, 4
      %s102 = int_to_ptr.hbm [resolvable:$true] %s101
      %s103 = sshll.u32 [#allocation13], 4
      %s104 = int_to_ptr.vmem [resolvable:$true] %s103
      %106 = dma.hbm_to_vmem [thread:$0]  %s102, 16, %s104, [#allocation12]
    $region29: #{tpu_custom_call.1} parent=1 // pred_fallthru
      _
    // Predicated region
    $region30: #{tpu_custom_call.1} parent=1 // pred_check
      _
    $region31: #{tpu_custom_call.1} parent=1 // pred_check_branch
      %108 = sbr.rel (0) target = $region33
    $region32: #{tpu_custom_call.1} parent=1 // pred_region
      %110 = vsyncadd [#allocation15], 0
      %s111 = sshll.u32 %s7, 4
      %s112 = int_to_ptr.hbm [resolvable:$true] %s111
      %s113 = sshll.u32 [#allocation14], 4
      %s114 = int_to_ptr.vmem [resolvable:$true] %s113
      %119 = dma.hbm_to_vmem [thread:$0]  %s112, 2048, %s114, [#allocation15], 128, 128, 8
    $region33: #{tpu_custom_call.1} parent=1 // pred_fallthru
      _
    // Predicated region
    $region34: #{tpu_custom_call.1} parent=1 // pred_check
      _
    $region35: #{tpu_custom_call.1} parent=1 // pred_check_branch
      %121 = sbr.rel (0) target = $region37
    $region36: #{tpu_custom_call.1} parent=1 // pred_region
      %123 = vsyncadd [#allocation15], 0
      %s125 = sshll.u32 %s8, 4
      %s126 = int_to_ptr.hbm [resolvable:$true] %s125
      %s127 = sshll.u32 [#allocation16], 4
      %s128 = int_to_ptr.vmem [resolvable:$true] %s127
      %130 = dma.hbm_to_vmem [thread:$0]  %s126, 32, %s128, [#allocation15]
    $region37: #{tpu_custom_call.1} parent=1 // pred_fallthru
      _
    // Predicated region
    $region38: #{tpu_custom_call.1} parent=1 // pred_check
      _
    $region39: #{tpu_custom_call.1} parent=1 // pred_check_branch
      %132 = sbr.rel (0) target = $region41
    $region40: #{tpu_custom_call.1} parent=1 // pred_region
      _
    $region41: #{tpu_custom_call.1} parent=1 // pred_fallthru
      _
    // Predicated region
    $region42: #{tpu_custom_call.1} parent=1 // pred_check
      _
    $region43: #{tpu_custom_call.1} parent=1 // pred_check_branch
      %134 = sbr.rel (0) target = $region45
    $region44: #{tpu_custom_call.1} parent=1 // pred_region
      %136 = dma.done [#allocation3], 128
    $region45: #{tpu_custom_call.1} parent=1 // pred_fallthru
      _
    // Predicated region
    $region46: #{tpu_custom_call.1} parent=1 // pred_check
      _
    $region47: #{tpu_custom_call.1} parent=1 // pred_check_branch
      %138 = sbr.rel (0) target = $region49
    $region48: #{tpu_custom_call.1} parent=1 // pred_region
      %140 = dma.done [#allocation6], 2048
    $region49: #{tpu_custom_call.1} parent=1 // pred_fallthru
      _
    // Predicated region
    $region50: #{tpu_custom_call.1} parent=1 // pred_check
      _
    $region51: #{tpu_custom_call.1} parent=1 // pred_check_branch
      %142 = sbr.rel (0) target = $region53
    $region52: #{tpu_custom_call.1} parent=1 // pred_region
      %144 = dma.done [#allocation6], 16
    $region53: #{tpu_custom_call.1} parent=1 // pred_fallthru
      _
    // Predicated region
    $region54: #{tpu_custom_call.1} parent=1 // pred_check
      _
    $region55: #{tpu_custom_call.1} parent=1 // pred_check_branch
      %146 = sbr.rel (0) target = $region57
    $region56: #{tpu_custom_call.1} parent=1 // pred_region
      %148 = dma.done [#allocation9], 1024
    $region57: #{tpu_custom_call.1} parent=1 // pred_fallthru
      _
    // Predicated region
    $region58: #{tpu_custom_call.1} parent=1 // pred_check
      _
    $region59: #{tpu_custom_call.1} parent=1 // pred_check_branch
      %150 = sbr.rel (0) target = $region61
    $region60: #{tpu_custom_call.1} parent=1 // pred_region
      %152 = dma.done [#allocation9], 16
    $region61: #{tpu_custom_call.1} parent=1 // pred_fallthru
      _
    // Predicated region
    $region62: #{tpu_custom_call.1} parent=1 // pred_check
      _
    $region63: #{tpu_custom_call.1} parent=1 // pred_check_branch
      %154 = sbr.rel (0) target = $region65
    $region64: #{tpu_custom_call.1} parent=1 // pred_region
      %156 = dma.done [#allocation12], 256
    $region65: #{tpu_custom_call.1} parent=1 // pred_fallthru
      _
    // Predicated region
    $region66: #{tpu_custom_call.1} parent=1 // pred_check
      _
    $region67: #{tpu_custom_call.1} parent=1 // pred_check_branch
      %158 = sbr.rel (0) target = $region69
    $region68: #{tpu_custom_call.1} parent=1 // pred_region
      %160 = dma.done [#allocation12], 16
    $region69: #{tpu_custom_call.1} parent=1 // pred_fallthru
      _
    // Predicated region
    $region70: #{tpu_custom_call.1} parent=1 // pred_check
      _
    $region71: #{tpu_custom_call.1} parent=1 // pred_check_branch
      %162 = sbr.rel (0) target = $region73
    $region72: #{tpu_custom_call.1} parent=1 // pred_region
      %164 = dma.done [#allocation15], 2048
    $region73: #{tpu_custom_call.1} parent=1 // pred_fallthru
      _
    // Predicated region
    $region74: #{tpu_custom_call.1} parent=1 // pred_check
      _
    $region75: #{tpu_custom_call.1} parent=1 // pred_check_branch
      %166 = sbr.rel (0) target = $region77
    $region76: #{tpu_custom_call.1} parent=1 // pred_region
      %168 = dma.done [#allocation15], 32
    $region77: #{tpu_custom_call.1} parent=1 // pred_fallthru
      _
    %v170 = vld [vmem:[#allocation2] sm:$0xff]
    %v171 = vld [vmem:[#allocation5] sm:$0xf]
    %v172 = vld [vmem:[#allocation5 + $0x4] sm:$0xf]
    %v173 = vld [vmem:[#allocation5 + $0x8] sm:$0xf]
    %v174 = vld [vmem:[#allocation5 + $0xc] sm:$0xf]
    %v175 = vld [vmem:[#allocation5 + $0x10] sm:$0xf]
    %v176 = vld [vmem:[#allocation5 + $0x14] sm:$0xf]
    %v177 = vld [vmem:[#allocation5 + $0x18] sm:$0xf]
    %v178 = vld [vmem:[#allocation5 + $0x1c] sm:$0xf]
    %v179 = vld [vmem:[#allocation5 + $0x20] sm:$0xf]
    %v180 = vld [vmem:[#allocation5 + $0x24] sm:$0xf]
    %v181 = vld [vmem:[#allocation5 + $0x28] sm:$0xf]
    %v182 = vld [vmem:[#allocation5 + $0x2c] sm:$0xf]
    %v183 = vld [vmem:[#allocation5 + $0x30] sm:$0xf]
    %v184 = vld [vmem:[#allocation5 + $0x34] sm:$0xf]
    %v185 = vld [vmem:[#allocation5 + $0x38] sm:$0xf]
    %v186 = vld [vmem:[#allocation5 + $0x3c] sm:$0xf]
    %v187 = vld [vmem:[#allocation5 + $0x40] sm:$0xf]
    %v188 = vld [vmem:[#allocation5 + $0x44] sm:$0xf]
    %v189 = vld [vmem:[#allocation5 + $0x48] sm:$0xf]
    %v190 = vld [vmem:[#allocation5 + $0x4c] sm:$0xf]
    %v191 = vld [vmem:[#allocation5 + $0x50] sm:$0xf]
    %v192 = vld [vmem:[#allocation5 + $0x54] sm:$0xf]
    %v193 = vld [vmem:[#allocation5 + $0x58] sm:$0xf]
    %v194 = vld [vmem:[#allocation5 + $0x5c] sm:$0xf]
    %v195 = vld [vmem:[#allocation5 + $0x60] sm:$0xf]
    %v196 = vld [vmem:[#allocation5 + $0x64] sm:$0xf]
    %v197 = vld [vmem:[#allocation5 + $0x68] sm:$0xf]
    %v198 = vld [vmem:[#allocation5 + $0x6c] sm:$0xf]
    %v199 = vld [vmem:[#allocation5 + $0x70] sm:$0xf]
    %v200 = vld [vmem:[#allocation5 + $0x74] sm:$0xf]
    %v201 = vld [vmem:[#allocation5 + $0x78] sm:$0xf]
    %v202 = vld [vmem:[#allocation5 + $0x7c] sm:$0xf]
    %v203 = vld [vmem:[#allocation7] sm:$0x1]
    %v205 = vperm.slane %v203, 0
    %v208 = vunpack.c.l.b16 %v170
    %v209 = vunpack.c.h.b16 %v170
    %v210 = vpack.c.b16 %v208, %v208
    %v211 = vpack.c.b16 %v209, %v209
    %v246 = vunpack.c.l.b16 %v171
    %v247 = vunpack.c.l.b16 %v172
    %v248 = vunpack.c.l.b16 %v173
    %v249 = vunpack.c.l.b16 %v174
    %v250 = vunpack.c.l.b16 %v175
    %v251 = vunpack.c.l.b16 %v176
    %v252 = vunpack.c.l.b16 %v177
    %v253 = vunpack.c.l.b16 %v178
    %v254 = vunpack.c.l.b16 %v179
    %v255 = vunpack.c.l.b16 %v180
    %v256 = vunpack.c.l.b16 %v181
    %v257 = vunpack.c.l.b16 %v182
    %v258 = vunpack.c.l.b16 %v183
    %v259 = vunpack.c.l.b16 %v184
    %v260 = vunpack.c.l.b16 %v185
    %v261 = vunpack.c.l.b16 %v186
    %v262 = vunpack.c.l.b16 %v187
    %v263 = vunpack.c.l.b16 %v188
    %v264 = vunpack.c.l.b16 %v189
    %v265 = vunpack.c.l.b16 %v190
    %v266 = vunpack.c.l.b16 %v191
    %v267 = vunpack.c.l.b16 %v192
    %v268 = vunpack.c.l.b16 %v193
    %v269 = vunpack.c.l.b16 %v194
    %v270 = vunpack.c.l.b16 %v195
    %v271 = vunpack.c.l.b16 %v196
    %v272 = vunpack.c.l.b16 %v197
    %v273 = vunpack.c.l.b16 %v198
    %v274 = vunpack.c.l.b16 %v199
    %v275 = vunpack.c.l.b16 %v200
    %v276 = vunpack.c.l.b16 %v201
    %v277 = vunpack.c.l.b16 %v202
    %v278 = vpack.c.b16 %v247, %v246
    %v279 = vpack.c.b16 %v249, %v248
    %v280 = vpack.c.b16 %v251, %v250
    %v281 = vpack.c.b16 %v253, %v252
    %v282 = vpack.c.b16 %v255, %v254
    %v283 = vpack.c.b16 %v257, %v256
    %v284 = vpack.c.b16 %v259, %v258
    %v285 = vpack.c.b16 %v261, %v260
    %v286 = vpack.c.b16 %v263, %v262
    %v287 = vpack.c.b16 %v265, %v264
    %v288 = vpack.c.b16 %v267, %v266
    %v289 = vpack.c.b16 %v269, %v268
    %v290 = vpack.c.b16 %v271, %v270
    %v291 = vpack.c.b16 %v273, %v272
    %v292 = vpack.c.b16 %v275, %v274
    %v293 = vpack.c.b16 %v277, %v276
    %310 = vmatpush.bf16.msra.mxu0 %v285
    %311 = vmatpush.bf16.msra.mxu0 %v284
    %312 = vmatpush.bf16.msra.mxu0 %v283
    %313 = vmatpush.bf16.msra.mxu0 %v282
    %314 = vmatpush.bf16.msra.mxu0 %v281
    %315 = vmatpush.bf16.msra.mxu0 %v280
    %316 = vmatpush.bf16.msra.mxu0 %v279
    %317 = vmatpush.bf16.msra.mxu0 %v278
    %318 = vmatmul.bf16.gmra.mxu0 %v210
    %v319 = vpop.f32.mrf.mxu0
    %v320 = vadd.f32 %v205, %v319
    %v321 = vpop.f32.mrf.mxu0
    %322 = vdwg.mxu0
    %323 = vmatpush.bf16.msra.mxu0 %v293
    %324 = vmatpush.bf16.msra.mxu0 %v292
    %325 = vmatpush.bf16.msra.mxu0 %v291
    %326 = vmatpush.bf16.msra.mxu0 %v290
    %327 = vmatpush.bf16.msra.mxu0 %v289
    %328 = vmatpush.bf16.msra.mxu0 %v288
    %329 = vmatpush.bf16.msra.mxu0 %v287
    %330 = vmatpush.bf16.msra.mxu0 %v286
    %331 = vmatmul.bf16.gmra.mxu0 %v211
    %v332 = vpop.f32.mrf.mxu0
    %v333 = vadd.f32 %v320, %v332
    %v334 = vpop.f32.mrf.mxu0
    %335 = vdwg.mxu0
    %v336 = vmax.f32 %v333, 0.0
    %v337 = vpack.c.bf16 %v336, %v336
    %v338 = vld [vmem:[#allocation8] sm:$0xf]
    %v339 = vld [vmem:[#allocation8 + $0x4] sm:$0xf]
    %v340 = vld [vmem:[#allocation8 + $0x8] sm:$0xf]
    %v341 = vld [vmem:[#allocation8 + $0xc] sm:$0xf]
    %v342 = vld [vmem:[#allocation8 + $0x10] sm:$0xf]
    %v343 = vld [vmem:[#allocation8 + $0x14] sm:$0xf]
    %v344 = vld [vmem:[#allocation8 + $0x18] sm:$0xf]
    %v345 = vld [vmem:[#allocation8 + $0x1c] sm:$0xf]
    %v346 = vld [vmem:[#allocation8 + $0x20] sm:$0xf]
    %v347 = vld [vmem:[#allocation8 + $0x24] sm:$0xf]
    %v348 = vld [vmem:[#allocation8 + $0x28] sm:$0xf]
    %v349 = vld [vmem:[#allocation8 + $0x2c] sm:$0xf]
    %v350 = vld [vmem:[#allocation8 + $0x30] sm:$0xf]
    %v351 = vld [vmem:[#allocation8 + $0x34] sm:$0xf]
    %v352 = vld [vmem:[#allocation8 + $0x38] sm:$0xf]
    %v353 = vld [vmem:[#allocation8 + $0x3c] sm:$0xf]
    %v354 = vld [vmem:[#allocation10] sm:$0x1]
    %v356 = vperm.slane %v354, 0
    %v374 = vunpack.c.l.b16 %v338
    %v375 = vunpack.c.l.b16 %v339
    %v376 = vunpack.c.l.b16 %v340
    %v377 = vunpack.c.l.b16 %v341
    %v378 = vunpack.c.l.b16 %v342
    %v379 = vunpack.c.l.b16 %v343
    %v380 = vunpack.c.l.b16 %v344
    %v381 = vunpack.c.l.b16 %v345
    %v382 = vunpack.c.l.b16 %v346
    %v383 = vunpack.c.l.b16 %v347
    %v384 = vunpack.c.l.b16 %v348
    %v385 = vunpack.c.l.b16 %v349
    %v386 = vunpack.c.l.b16 %v350
    %v387 = vunpack.c.l.b16 %v351
    %v388 = vunpack.c.l.b16 %v352
    %v389 = vunpack.c.l.b16 %v353
    %v390 = vpack.c.b16 %v375, %v374
    %v391 = vpack.c.b16 %v377, %v376
    %v392 = vpack.c.b16 %v379, %v378
    %v393 = vpack.c.b16 %v381, %v380
    %v394 = vpack.c.b16 %v383, %v382
    %v395 = vpack.c.b16 %v385, %v384
    %v396 = vpack.c.b16 %v387, %v386
    %v397 = vpack.c.b16 %v389, %v388
    %406 = vmatpush.bf16.msra.mxu0 %v397
    %407 = vmatpush.bf16.msra.mxu0 %v396
    %408 = vmatpush.bf16.msra.mxu0 %v395
    %409 = vmatpush.bf16.msra.mxu0 %v394
    %410 = vmatpush.bf16.msra.mxu0 %v393
    %411 = vmatpush.bf16.msra.mxu0 %v392
    %412 = vmatpush.bf16.msra.mxu0 %v391
    %413 = vmatpush.bf16.msra.mxu0 %v390
    %414 = vmatmul.bf16.gmra.mxu0 %v337
    %v415 = vpop.f32.mrf.mxu0
    %v416 = vadd.f32 %v356, %v415
    %v417 = vpop.f32.mrf.mxu0
    %418 = vdwg.mxu0
    %v419 = vld [vmem:[%s9] sm:$0xff]
    %v420 = vmul.f32 %v416, 0.5
    %v421 = vmul.f32 %v420, 1.442695
    %v422 = vpow.pop %v421
    %424 = vrot.lane.b32.xlu0 %v422, 96
    %v425 = vpop.permute.xlu0 %424
    %v427 = vmul.f32 %v419, %v425
    %v428 = vadd.f32 %v416, %v427
    %v429 = vpack.c.bf16 %v428, %v428
    %v430 = vld [vmem:[#allocation11] sm:$0xf]
    %v431 = vld [vmem:[#allocation11 + $0x4] sm:$0xf]
    %v432 = vld [vmem:[#allocation11 + $0x8] sm:$0xf]
    %v433 = vld [vmem:[#allocation11 + $0xc] sm:$0xf]
    %v434 = vld [vmem:[#allocation13] sm:$0x1]
    %v436 = vperm.slane %v434, 0
    %v442 = vunpack.c.l.b16 %v430
    %v443 = vunpack.c.l.b16 %v431
    %v444 = vunpack.c.l.b16 %v432
    %v445 = vunpack.c.l.b16 %v433
    %v446 = vpack.c.b16 %v443, %v442
    %v447 = vpack.c.b16 %v445, %v444
    %vm450 = vcmask 261120
    %v452 = vsel %vm450, %v429, 0
    %454 = vmatpush.bf16.msra.mxu0 0
    %455 = vmatpush.bf16.msra.mxu0 0
    %456 = vmatpush.bf16.msra.mxu0 0
    %457 = vmatpush.bf16.msra.mxu0 0
    %458 = vmatpush.bf16.msra.mxu0 0
    %459 = vmatpush.bf16.msra.mxu0 0
    %460 = vmatpush.bf16.msra.mxu0 %v447
    %461 = vmatpush.bf16.msra.mxu0 %v446
    %462 = vmatmul.bf16.gmra.mxu0 %v452
    %v463 = vpop.f32.mrf.mxu0
    %v464 = vadd.f32 %v436, %v463
    %v465 = vpop.f32.mrf.mxu0
    %466 = vdwg.mxu0
    %v467 = vmax.f32 %v464, 0.0
    %v468 = vpack.c.bf16 %v467, %v467
    %v469 = vld [vmem:[#allocation14] sm:$0xff]
    %v470 = vld [vmem:[#allocation14 + $0x8] sm:$0xff]
    %v471 = vld [vmem:[#allocation14 + $0x10] sm:$0xff]
    %v472 = vld [vmem:[#allocation14 + $0x18] sm:$0xff]
    %v473 = vld [vmem:[#allocation14 + $0x20] sm:$0xff]
    %v474 = vld [vmem:[#allocation14 + $0x28] sm:$0xff]
    %v475 = vld [vmem:[#allocation14 + $0x30] sm:$0xff]
    %v476 = vld [vmem:[#allocation14 + $0x38] sm:$0xff]
    %v477 = vld [vmem:[#allocation14 + $0x40] sm:$0xff]
    %v478 = vld [vmem:[#allocation14 + $0x48] sm:$0xff]
    %v479 = vld [vmem:[#allocation14 + $0x50] sm:$0xff]
    %v480 = vld [vmem:[#allocation14 + $0x58] sm:$0xff]
    %v481 = vld [vmem:[#allocation14 + $0x60] sm:$0xff]
    %v482 = vld [vmem:[#allocation14 + $0x68] sm:$0xff]
    %v483 = vld [vmem:[#allocation14 + $0x70] sm:$0xff]
    %v484 = vld [vmem:[#allocation14 + $0x78] sm:$0xff]
    %v485 = vld [vmem:[#allocation16] sm:$0x3]
    %v487 = vperm.slane %v485, 0
    %v488 = vperm.slane %v485, 1
    %v507 = vunpack.c.l.b16 %v469
    %v508 = vunpack.c.h.b16 %v469
    %v509 = vunpack.c.l.b16 %v470
    %v510 = vunpack.c.h.b16 %v470
    %v511 = vunpack.c.l.b16 %v471
    %v512 = vunpack.c.h.b16 %v471
    %v513 = vunpack.c.l.b16 %v472
    %v514 = vunpack.c.h.b16 %v472
    %v515 = vunpack.c.l.b16 %v473
    %v516 = vunpack.c.h.b16 %v473
    %v517 = vunpack.c.l.b16 %v474
    %v518 = vunpack.c.h.b16 %v474
    %v519 = vunpack.c.l.b16 %v475
    %v520 = vunpack.c.h.b16 %v475
    %v521 = vunpack.c.l.b16 %v476
    %v522 = vunpack.c.h.b16 %v476
    %v523 = vunpack.c.l.b16 %v477
    %v524 = vunpack.c.h.b16 %v477
    %v525 = vunpack.c.l.b16 %v478
    %v526 = vunpack.c.h.b16 %v478
    %v527 = vunpack.c.l.b16 %v479
    %v528 = vunpack.c.h.b16 %v479
    %v529 = vunpack.c.l.b16 %v480
    %v530 = vunpack.c.h.b16 %v480
    %v531 = vunpack.c.l.b16 %v481
    %v532 = vunpack.c.h.b16 %v481
    %v533 = vunpack.c.l.b16 %v482
    %v534 = vunpack.c.h.b16 %v482
    %v535 = vunpack.c.l.b16 %v483
    %v536 = vunpack.c.h.b16 %v483
    %v537 = vunpack.c.l.b16 %v484
    %v538 = vunpack.c.h.b16 %v484
    %v539 = vpack.c.b16 %v509, %v507
    %v540 = vpack.c.b16 %v510, %v508
    %v541 = vpack.c.b16 %v513, %v511
    %v542 = vpack.c.b16 %v514, %v512
    %v543 = vpack.c.b16 %v517, %v515
    %v544 = vpack.c.b16 %v518, %v516
    %v545 = vpack.c.b16 %v521, %v519
    %v546 = vpack.c.b16 %v522, %v520
    %v547 = vpack.c.b16 %v525, %v523
    %v548 = vpack.c.b16 %v526, %v524
    %v549 = vpack.c.b16 %v529, %v527
    %v550 = vpack.c.b16 %v530, %v528
    %v551 = vpack.c.b16 %v533, %v531
    %v552 = vpack.c.b16 %v534, %v532
    %v553 = vpack.c.b16 %v537, %v535
    %v554 = vpack.c.b16 %v538, %v536
    %571 = vmatpush.bf16.msra.mxu0 %v553
    %572 = vmatpush.bf16.msra.mxu0 %v551
    %573 = vmatpush.bf16.msra.mxu0 %v549
    %574 = vmatpush.bf16.msra.mxu0 %v547
    %575 = vmatpush.bf16.msra.mxu0 %v545
    %576 = vmatpush.bf16.msra.mxu0 %v543
    %577 = vmatpush.bf16.msra.mxu0 %v541
    %578 = vmatpush.bf16.msra.mxu0 %v539
    %579 = vmatmul.bf16.gmra.mxu0 %v468
    %v580 = vpop.f32.mrf.mxu0
    %v581 = vadd.f32 %v487, %v580
    %v582 = vpop.f32.mrf.mxu0
    %583 = vdwg.mxu0
    %584 = vmatpush.bf16.msra.mxu0 %v554
    %585 = vmatpush.bf16.msra.mxu0 %v552
    %586 = vmatpush.bf16.msra.mxu0 %v550
    %587 = vmatpush.bf16.msra.mxu0 %v548
    %588 = vmatpush.bf16.msra.mxu0 %v546
    %589 = vmatpush.bf16.msra.mxu0 %v544
    %590 = vmatpush.bf16.msra.mxu0 %v542
    %591 = vmatpush.bf16.msra.mxu0 %v540
    %592 = vmatmul.bf16.gmra.mxu0 %v468
    %v593 = vpop.f32.mrf.mxu0
    %v594 = vadd.f32 %v488, %v593
    %v595 = vpop.f32.mrf.mxu0
    %596 = vdwg.mxu0
    %v597 = vmul.f32 %v581, 0.5
    %v598 = vmul.f32 %v594, 0.5
    %v599 = vtanh.pop %v597
    %v600 = vtanh.pop %v598
    %v601 = vmul.f32 %v599, 0.5
    %v602 = vmul.f32 %v600, 0.5
    %v603 = vadd.f32 %v601, 0.5
    %v604 = vadd.f32 %v602, 0.5
    %605 = vst [vmem:[#allocation17] sm:$0xff] %v603
    %606 = vst [vmem:[#allocation17 + $0x8] sm:$0xff] %v604
    %607 = vst [vmem:[#allocation18] sm:$0xff] %v416
    // Predicated region
    $region78: #{tpu_custom_call.1} parent=1 // pred_check
      _
    $region79: #{tpu_custom_call.1} parent=1 // pred_check_branch
      %609 = sbr.rel (0) target = $region81
    $region80: #{tpu_custom_call.1} parent=1 // pred_region
      %611 = vsyncadd [#allocation4], 0
      %s613 = sshll.u32 [#allocation17], 4
      %s614 = int_to_ptr.vmem [resolvable:$true] %s613
      %s615 = sshll.u32 %s10, 4
      %s616 = int_to_ptr.hbm [resolvable:$true] %s615
      %618 = dma.vmem_to_hbm [thread:$0]  %s614, 256, %s616, [#allocation4]
    $region81: #{tpu_custom_call.1} parent=1 // pred_fallthru
      _
    // Predicated region
    $region82: #{tpu_custom_call.1} parent=1 // pred_check
      _
    $region83: #{tpu_custom_call.1} parent=1 // pred_check_branch
      %620 = sbr.rel (0) target = $region85
    $region84: #{tpu_custom_call.1} parent=1 // pred_region
      %622 = vsyncadd [#allocation19], 0
      %s624 = sshll.u32 [#allocation18], 4
      %s625 = int_to_ptr.vmem [resolvable:$true] %s624
      %s626 = sshll.u32 %s11, 4
      %s627 = int_to_ptr.hbm [resolvable:$true] %s626
      %629 = dma.vmem_to_hbm [thread:$0]  %s625, 128, %s627, [#allocation19]
    $region85: #{tpu_custom_call.1} parent=1 // pred_fallthru
      _
    // Predicated region
    $region86: #{tpu_custom_call.1} parent=1 // pred_check
      _
    $region87: #{tpu_custom_call.1} parent=1 // pred_check_branch
      %631 = sbr.rel (0) target = $region89
    $region88: #{tpu_custom_call.1} parent=1 // pred_region
      %633 = dma.done [#allocation4], 256
    $region89: #{tpu_custom_call.1} parent=1 // pred_fallthru
      _
    // Predicated region
    $region90: #{tpu_custom_call.1} parent=1 // pred_check
      _
    $region91: #{tpu_custom_call.1} parent=1 // pred_check_branch
      %635 = sbr.rel (0) target = $region93
    $region92: #{tpu_custom_call.1} parent=1 // pred_region
      %637 = dma.done [#allocation19], 128
    $region93: #{tpu_custom_call.1} parent=1 // pred_fallthru
      _
    %638 = vsyncpa [#allocation3], 1
    %639 = vsyncpa [#allocation6], 1
    %640 = vsyncpa [#allocation9], 1
    %641 = vsyncpa [#allocation12], 1
    %642 = vsyncpa [#allocation15], 1
    %643 = vsyncpa [#allocation4], 1
    %644 = vsyncpa [#allocation19], 1

</llo_original>
